<compile_context>
chip_gen: v5e
topology: v5e:2x2
jax: 0.10.0
libtpu: 0.0.40
codegen_flags: <defaults>
</compile_context>

<pallas_src>
import numpy as np
import jax
import jax.numpy as jnp
from jax.experimental import pallas as pl
from jax.experimental.pallas import tpu as pltpu


BITS = 8
QMIN = float(-(1 << (BITS - 1)))           # -128
QMAX = float((1 << (BITS - 1)) - 1)        #  127
QRANGE = float(max(abs(QMIN), abs(QMAX)))  #  128
_EPS = 1e-12


# ---------------------------------------------------------------------------
# helpers
# ---------------------------------------------------------------------------
def _round_up(a, b):
    return -(-a // b) * b


def _budgets():
    """(working-set budget, vmem_limit_bytes), generation-aware when possible."""
    vmem_cap = 64 << 20                       # conservative default (v7x per-TC VMEM)
    fn = getattr(pltpu, "get_tpu_info", None)
    if fn is not None:
        try:
            cap = getattr(fn(), "vmem_capacity_bytes", None)
            if cap:
                vmem_cap = int(cap)
        except Exception:
            pass
    budget = vmem_cap // 4                    # double-buffered working-set target
    vmem_limit = min(vmem_cap // 2, 96 << 20) # 64 MiB on v5e/v6e, 32 MiB on v7x
    return budget, vmem_limit


def _choose_tile(hw, rows, budget_bytes, bytes_per_elem=4):
    """Largest 128*2^k spatial tile whose rows x tile working set fits the
    budget, capped near hw and keeping zero-padding waste <= ~12.5%."""
    limit = _round_up(hw, 128)
    tile = 128
    while tile * 2 <= limit and rows * (tile * 2) * bytes_per_elem <= budget_bytes:
        tile *= 2
    while tile > 128 and _round_up(hw, tile) * 8 > hw * 9:   # >12.5% padding waste
        tile //= 2
    return tile


# ---------------------------------------------------------------------------
# Stage 1: per-batch abs-max (VPU elementwise accumulation, one reduce at end)
# ---------------------------------------------------------------------------
def _make_absmax_kernel(channels):
    def kernel(*refs):
        x_refs, o_ref, acc_ref = refs[:-2], refs[-2], refs[-1]
        j = pl.program_id(1)

        @pl.when(j == 0)
        def _():
            acc_ref[...] = jnp.zeros_like(acc_ref)       # identity for abs-max

        acc = acc_ref[...]                                # (8, tile)
        for x_ref, c in zip(x_refs, channels):
            xa = jnp.abs(x_ref[...].astype(jnp.float32))  # (1, c, tile)
            ngrp = c // 8
            for g in range(ngrp):                         # aligned (8, tile) slabs: pure VPU max
                acc = jnp.maximum(acc, xa[0, g * 8:(g + 1) * 8, :])
            if c % 8:                                     # rare non-8-aligned tail
                acc = jnp.maximum(acc, jnp.max(xa[0, ngrp * 8:c, :]))
        acc_ref[...] = acc

        @pl.when(j == pl.num_programs(1) - 1)
        def _():
            o_ref[...] = jnp.broadcast_to(jnp.max(acc_ref[...]), (1, 1, 1))
    return kernel


# ---------------------------------------------------------------------------
# Stage 2: fake-quantize + fused channel concat
# ---------------------------------------------------------------------------
def _make_fq_concat_kernel(offsets):
    def kernel(s_ref, *refs):
        x_refs, o_ref = refs[:-1], refs[-1]
        scale = s_ref[0]
        inv_scale = s_ref[1]                              # precomputed, no per-step divide
        for x_ref, c0, c1 in zip(x_refs, offsets[:-1], offsets[1:]):
            q = x_ref[...].astype(jnp.float32) * inv_scale
            # round half away from zero (torch Round.forward), cheapened chain
            r = jnp.floor(jnp.abs(q) + 0.5)
            r = jnp.where(q < 0.0, -r, r)
            # NOTE: c0 multiple of 8 keeps this store sublane-aligned.
            o_ref[:, c0:c1, :] = (jnp.clip(r, QMIN, QMAX) * scale).astype(o_ref.dtype)
    return kernel


# ---------------------------------------------------------------------------
# wrapper
# ---------------------------------------------------------------------------
def quantized_feature_concat(layer_outputs):
    """Fake-quantize every NCHW tensor with a shared 8-bit scale and concat
    along channels.  Returns (out of shape (B, sum(C_i), H, W), scale)."""
    assert len(layer_outputs) >= 1
    if len(layer_outputs) == 1:
        # TODO(synk): torch's non-multiple / groups branches are passthrough
        # (no quantization); scale buffer stays zero.
        return layer_outputs[0], jnp.zeros((), jnp.float32)

    B, _, H, W = layer_outputs[0].shape
    for t in layer_outputs:
        assert t.shape[0] == B and t.shape[2:] == (H, W), "layers must share B/H/W"

    channels = [int(t.shape[1]) for t in layer_outputs]
    c_total = int(sum(channels))
    offsets = tuple(int(o) for o in np.cumsum([0] + channels))
    hw = H * W
    out_dtype = jnp.result_type(*[t.dtype for t in layer_outputs])

    budget, vmem_limit = _budgets()
    tile1 = _choose_tile(hw, rows=2 * c_total, budget_bytes=budget)   # stage 1: inputs only
    tile2 = _choose_tile(hw, rows=4 * c_total, budget_bytes=budget)   # stage 2: inputs + output
    hw_pad = _round_up(hw, max(tile1, tile2))     # both tiles are 128*2^k -> both divide hw_pad

    # NCHW -> (B, C, H*W): spatial axis stays lane-dense.
    xs3 = [t.reshape(B, t.shape[1], hw) for t in layer_outputs]
    if hw_pad != hw:
        # zero padding is harmless: abs-max >= 0 and fq(0) == 0; padded lanes sliced away.
        xs3 = [jnp.pad(x, ((0, 0), (0, 0), (0, hw_pad - hw))) for x in xs3]

    grid1 = (B, hw_pad // tile1)
    grid2 = (B, hw_pad // tile2)

    # ---- Stage 1: per-batch abs-max partials --------------------------------
    partials = pl.pallas_call(
        _make_absmax_kernel(channels),
        out_shape=jax.ShapeDtypeStruct((B, 1, 1), jnp.float32),
        grid=grid1,
        in_specs=[pl.BlockSpec((1, c, tile1), lambda b, j: (b, 0, j)) for c in channels],
        out_specs=pl.BlockSpec((1, 1, 1), lambda b, j: (b, 0, 0)),
        scratch_shapes=[pltpu.VMEM((8, tile1), jnp.float32)],
        compiler_params=pltpu.CompilerParams(
            dimension_semantics=("parallel", "arbitrary"),
            vmem_limit_bytes=vmem_limit),
    )(*xs3)

    float_range = jnp.max(partials)
    scale = jnp.maximum(float_range / QRANGE, _EPS).astype(jnp.float32)
    scalars = jnp.stack([scale, 1.0 / scale]).astype(jnp.float32)   # [scale, inv_scale]

    # ---- Stage 2: fake-quant + fused channel concat --------------------------
    out3 = pl.pallas_call(
        _make_fq_concat_kernel(offsets),
        out_shape=jax.ShapeDtypeStruct((B, c_total, hw_pad), out_dtype),
        grid_spec=pltpu.PrefetchScalarGridSpec(
            num_scalar_prefetch=1,
            grid=grid2,
            in_specs=[pl.BlockSpec((1, c, tile2), lambda b, j, s: (b, 0, j))
                      for c in channels],
            out_specs=pl.BlockSpec((1, c_total, tile2), lambda b, j, s: (b, 0, j)),
        ),
        compiler_params=pltpu.CompilerParams(
            dimension_semantics=("parallel", "parallel"),
            vmem_limit_bytes=vmem_limit),
    )(scalars, *xs3)

    out = out3[:, :, :hw].reshape(B, c_total, H, W)
    return out, scale


# ---------------------------------------------------------------------------
# pure-JAX reference (same reciprocal-multiply form as the kernel; the
# torch-literal v/scale can differ by 1 ulp pre-round — documented above)
# ---------------------------------------------------------------------------
def _reference(layer_outputs):
    xs = [t.astype(jnp.float32) for t in layer_outputs]
    fm = []
    for v in xs:
        fm.append(jnp.max(v))
        fm.append(jnp.abs(jnp.min(v)))
    float_range = jnp.max(jnp.stack(fm))
    scale = jnp.maximum(float_range / QRANGE, _EPS)
    inv = 1.0 / scale

    def fq(v):
        q = v * inv
        r = jnp.sign(q) * jnp.floor(jnp.abs(q) + 0.5)   # torch Round.forward
        return jnp.clip(r, QMIN, QMAX) * scale

    return jnp.concatenate([fq(v) for v in xs], axis=1), scale


if __name__ == "__main__":
    key = jax.random.PRNGKey(0)
    k1, k2 = jax.random.split(key)

    # Two route layers feeding the FeatureConcat: NCHW with different channel
    # counts (both multiples of 8 -> sublane-aligned concat offsets).
    x1 = jax.random.normal(k1, (2, 8, 16, 16), dtype=jnp.float32) * 3.0
    x2 = jax.random.normal(k2, (2, 16, 16, 16), dtype=jnp.float32) * 2.0

    out, scale = quantized_feature_concat([x1, x2])
    out = jax.block_until_ready(out)

    ref_out, ref_scale = _reference([x1, x2])
    assert out.shape == (2, 24, 16, 16)
    assert jnp.allclose(scale, ref_scale, atol=1e-7, rtol=1e-6), "scale mismatch vs reference"
    assert jnp.allclose(out, ref_out, atol=1e-5, rtol=1e-5), "output mismatch vs reference"

    print("KERNEL_OK")
</pallas_src>

<mosaic_0001>
module attributes {stable_mosaic.version = 11 : i64} {
  func.func @kernel(%arg0: i32, %arg1: i32, %arg2: memref<1x8x256xf32, #tpu.memory_space<vmem>>, %arg3: memref<1x16x256xf32, #tpu.memory_space<vmem>>, %arg4: memref<1x1x1xf32, #tpu.memory_space<vmem>>, %arg5: memref<8x256xf32, #tpu.memory_space<vmem>>) attributes {dimension_semantics = [#tpu.dimension_semantics<parallel>, #tpu.dimension_semantics<arbitrary>], iteration_bounds = array<i64: 2, 1>, scalar_prefetch = 0 : i64, scratch_operands = 1 : i64, tpu.core_type = #tpu.core_type<tc>, window_params = [{transform_indices = @transform_0, window_bounds = array<i64: 1, 8, 256>}, {transform_indices = @transform_1, window_bounds = array<i64: 1, 16, 256>}, {transform_indices = @transform_2, window_bounds = array<i64: 1, 1, 1>}]} {
    %c0_i32 = arith.constant 0 : i32
    %0 = arith.cmpi eq, %arg1, %c0_i32 : i32
    %1 = arith.extui %0 : i1 to i32
    %c0_i32_0 = arith.constant 0 : i32
    %2 = arith.cmpi ne, %1, %c0_i32_0 : i32
    scf.if %2 {
      %cst = arith.constant 0.000000e+00 : f32
      %20 = vector.broadcast %cst : f32 to vector<8x256xf32>
      %c0_12 = arith.constant 0 : index
      %c0_13 = arith.constant 0 : index
      %21 = vector.load %arg5[%c0_12, %c0_13] : memref<8x256xf32, #tpu.memory_space<vmem>>, vector<8x256xf32>
      tpu.vector_store %arg5[%c0_12, %c0_13], %20 {strides = array<i32>} : memref<8x256xf32, #tpu.memory_space<vmem>>, vector<8x256xf32>,
    } else {
    }
    %c0 = arith.constant 0 : index
    %c0_1 = arith.constant 0 : index
    %3 = vector.load %arg5[%c0, %c0_1] : memref<8x256xf32, #tpu.memory_space<vmem>>, vector<8x256xf32>
    %c0_2 = arith.constant 0 : index
    %c0_3 = arith.constant 0 : index
    %c0_4 = arith.constant 0 : index
    %4 = vector.load %arg2[%c0_2, %c0_3, %c0_4] : memref<1x8x256xf32, #tpu.memory_space<vmem>>, vector<1x8x256xf32>
    %5 = math.absf %4 : vector<1x8x256xf32>
    %6 = vector.shape_cast %5 : vector<1x8x256xf32> to vector<8x256xf32>
    %7 = arith.maximumf %3, %6 : vector<8x256xf32>
    %c0_5 = arith.constant 0 : index
    %c0_6 = arith.constant 0 : index
    %c0_7 = arith.constant 0 : index
    %8 = vector.load %arg3[%c0_5, %c0_6, %c0_7] : memref<1x16x256xf32, #tpu.memory_space<vmem>>, vector<1x16x256xf32>
    %9 = math.absf %8 : vector<1x16x256xf32>
    %10 = vector.extract_strided_slice %9 {offsets = [0, 0, 0], sizes = [1, 8, 256], strides = [1, 1, 1]} : vector<1x16x256xf32> to vector<1x8x256xf32>
    %11 = vector.shape_cast %10 : vector<1x8x256xf32> to vector<8x256xf32>
    %12 = arith.maximumf %7, %11 : vector<8x256xf32>
    %13 = vector.extract_strided_slice %9 {offsets = [0, 8, 0], sizes = [1, 8, 256], strides = [1, 1, 1]} : vector<1x16x256xf32> to vector<1x8x256xf32>
    %14 = vector.shape_cast %13 : vector<1x8x256xf32> to vector<8x256xf32>
    %15 = arith.maximumf %12, %14 : vector<8x256xf32>
    %c0_8 = arith.constant 0 : index
    %c0_9 = arith.constant 0 : index
    %16 = vector.load %arg5[%c0_8, %c0_9] : memref<8x256xf32, #tpu.memory_space<vmem>>, vector<8x256xf32>
    tpu.vector_store %arg5[%c0_8, %c0_9], %15 {strides = array<i32>} : memref<8x256xf32, #tpu.memory_space<vmem>>, vector<8x256xf32>,
    %c0_i32_10 = arith.constant 0 : i32
    %17 = arith.cmpi eq, %arg1, %c0_i32_10 : i32
    %18 = arith.extui %17 : i1 to i32
    %c0_i32_11 = arith.constant 0 : i32
    %19 = arith.cmpi ne, %18, %c0_i32_11 : i32
    scf.if %19 {
      %c0_12 = arith.constant 0 : index
      %c0_13 = arith.constant 0 : index
      %20 = vector.load %arg5[%c0_12, %c0_13] : memref<8x256xf32, #tpu.memory_space<vmem>>, vector<8x256xf32>
      %21 = vector.shape_cast %20 : vector<8x256xf32> to vector<1x8x256xf32>
      %cst = arith.constant dense<0xFF800000> : vector<1xf32>
      %22 = vector.multi_reduction <maximumf>, %21, %cst [1, 2] : vector<1x8x256xf32> to vector<1xf32>
      %23 = vector.shape_cast %22 : vector<1xf32> to vector<1x1x1xf32>
      %24 = vector.extract %23[0, 0, 0] : f32 from vector<1x1x1xf32>
      %25 = vector.broadcast %24 : f32 to vector<1x1x1xf32>
      %c0_14 = arith.constant 0 : index
      %c0_15 = arith.constant 0 : index
      %c0_16 = arith.constant 0 : index
      %26 = vector.load %arg4[%c0_14, %c0_15, %c0_16] : memref<1x1x1xf32, #tpu.memory_space<vmem>>, vector<1x1x1xf32>
      tpu.vector_store %arg4[%c0_14, %c0_15, %c0_16], %25 {strides = array<i32>} : memref<1x1x1xf32, #tpu.memory_space<vmem>>, vector<1x1x1xf32>,
    } else {
    }
    return
  }
  func.func @transform_0(%arg0: i32, %arg1: i32) -> (i32, i32, i32) {
    %c0_i32 = arith.constant 0 : i32
    %c0_i32_0 = arith.constant 0 : i32
    return %arg0, %c0_i32, %arg1 : i32, i32, i32
  }
  func.func @transform_1(%arg0: i32, %arg1: i32) -> (i32, i32, i32) {
    %c0_i32 = arith.constant 0 : i32
    %c0_i32_0 = arith.constant 0 : i32
    return %arg0, %c0_i32, %arg1 : i32, i32, i32
  }
  func.func @transform_2(%arg0: i32, %arg1: i32) -> (i32, i32, i32) {
    %c0_i32 = arith.constant 0 : i32
    %c0_i32_0 = arith.constant 0 : i32
    %c0_i32_1 = arith.constant 0 : i32
    return %arg0, %c0_i32, %c0_i32_0 : i32, i32, i32
  }
}

</mosaic_0001>

<llo_original>
// kernel: tpu_custom_call.1
$region0: #{tpu_custom_call.1}
  #allocation0 [shape = 'u32[]', space=smem, size = 0x4, offset = 0x4, fixed_abs, tag = 'smem constant byte address 0x4 - core index']
  #allocation1 [shape = 'u32[72,128]{1,0:T(1,128)}', space=vmem, size = 0x9000, scoped, tag = 'internal scratch']
  #allocation2 [shape = 'f32[8,256]{1,0:T(8,128)}', space=vmem, size = 0x2000, scoped, tag = 'scratch operand']
  %s0 = inlined_call_operand.hbm [shape: f32[2,8,256], index: 0, kind: input, shape index: {}]
  %s1 = inlined_call_operand.hbm [shape: f32[2,16,256], index: 1, kind: input, shape index: {}]
  %s2 = inlined_call_operand.vmem [shape: f32[2,1,1], index: 2, kind: output, shape index: {}]
  %s3 = sld [smem:[#allocation0]]
  $region57: #{tpu_custom_call.1} parent=0
    _
  %s5 = ssub.s32 1, %s3
  %s6 = scalar_select 0, %s5, %s3
  $region1: #{tpu_custom_call.1} parent=0
    #allocation3 [shape = 'u8[16384]{0}', space=vmem, size = 0x4000, scoped, tag = 'input window, operand 0']
    #allocation4 [shape = 's32[2]{0}', space=sflag, size = 0x8, scoped, tag = 'scoped memory for tpu_custom_call.1']
    #allocation5 [shape = 'u8[32768]{0}', space=vmem, size = 0x8000, scoped, tag = 'input window, operand 1']
    #allocation6 [shape = 's32[2]{0}', space=sflag, size = 0x8, scoped, tag = 'scoped memory for tpu_custom_call.1']
    %7 = vsyncpa [#allocation4], 0
    %s8 = scalar_lea.sflag [#allocation4], 1
    %9 = vsyncpa %s8, 0
    %10 = vsyncpa [#allocation6], 0
    %s11 = scalar_lea.sflag [#allocation6], 1
    %12 = vsyncpa %s11, 0
    loop: start=0, step=1, limit=4
    $region2: #{tpu_custom_call.1} parent=1 // loop_pre_header
      _
    $region3: #{tpu_custom_call.1} parent=1 // loop_header
      %s14 = sphi 0, %s18
      %p15 = scmp.ge.s32.totalorder %s14, 4
      %s21 = sphi 0, %s33
      %s22 = sphi 0, %s29
      %s23 = sphi 0, %s21
      %s24 = sphi 0, %s22
      %s25 = sphi 0, %s23
      %s26 = sphi 0, %s24
      %s38 = sphi 0, %s40
      %s41 = sphi 0, %s38
      %s42 = sphi 0, %s41
      %s58 = sphi 0, %s42
      %s66 = sphi 0, %s68
      %s69 = sphi 0, %s66
      %s70 = sphi 0, %s69
      %s86 = sphi 0, %s70
      %s92 = sphi 0, %s94
      %s95 = sphi 0, %s92
      %s96 = sphi 0, %s95
      %s112 = sphi 0, %s96
    $region4: #{tpu_custom_call.1} parent=1 // loop_header_branch
      %17 = sbr.rel (%p15) target = $region8
    $region5: #{tpu_custom_call.1} parent=1 // loop_body
      %s19 = ssub.s32 %s14, 1
      %s20 = ssub.s32 %s14, 2
      %s27 = sadd.s32 1, %s22
      %p28 = scmp.ge.s32.totalorder %s27, 1
      %s29 = scalar_select %p28, 0, %s27
      %s30 = sadd.s32 1, %s21
      %s31 = scalar_select %p28, %s30, %s21
      %p32 = scmp.ge.s32.totalorder %s31, 2
      %s33 = scalar_select %p32, 0, %s31
      %s34 = ssub.s32 %s21, %s33
      %s35 = ssub.s32 %s22, %s29
      %s36 = sor.u32 %s34, %s35
      %p37 = scmp.eq.s32.totalorder %s36, 0
      %s39 = sadd.s32 %s38, 1
      %s40 = scalar_select %p37, %s38, %s39
      %p43 = pneg %p37
      %p44 = scmp.eq.s32.totalorder %s14, 1
      %p45 = por %p43, %p44
      %p46 = scmp.ne.s32.totalorder %s38, %s41
      %p47 = scmp.eq.s32.totalorder %s14, 0
      %p48 = por %p46, %p47
      %p49 = scmp.ne.s32.totalorder %s38, %s41
      %p50 = scmp.eq.s32.totalorder %s19, 1
      %p51 = por %p49, %p50
      %p52 = scmp.ne.s32.totalorder %s41, %s42
      %p53 = scmp.eq.s32.totalorder %s19, 0
      %p54 = por %p52, %p53
      %p55 = scmp.ne.s32.totalorder %s41, %s42
      %p56 = scmp.eq.s32.totalorder %s20, 1
      %p57 = por %p55, %p56
      %p59 = scmp.ne.s32.totalorder %s42, %s58
      %p60 = scmp.eq.s32.totalorder %s20, 0
      %p61 = por %p59, %p60
      %s62 = ssub.s32 %s21, %s33
      %s63 = ssub.s32 %s22, %s29
      %s64 = sor.u32 %s62, %s63
      %p65 = scmp.eq.s32.totalorder %s64, 0
      %s67 = sadd.s32 %s66, 1
      %s68 = scalar_select %p65, %s66, %s67
      %p71 = pneg %p65
      %p72 = scmp.eq.s32.totalorder %s14, 1
      %p73 = por %p71, %p72
      %p74 = scmp.ne.s32.totalorder %s66, %s69
      %p75 = scmp.eq.s32.totalorder %s14, 0
      %p76 = por %p74, %p75
      %p77 = scmp.ne.s32.totalorder %s66, %s69
      %p78 = scmp.eq.s32.totalorder %s19, 1
      %p79 = por %p77, %p78
      %p80 = scmp.ne.s32.totalorder %s69, %s70
      %p81 = scmp.eq.s32.totalorder %s19, 0
      %p82 = por %p80, %p81
      %p83 = scmp.ne.s32.totalorder %s69, %s70
      %p84 = scmp.eq.s32.totalorder %s20, 1
      %p85 = por %p83, %p84
      %p87 = scmp.ne.s32.totalorder %s70, %s86
      %p88 = scmp.eq.s32.totalorder %s20, 0
      %p89 = por %p87, %p88
      %s90 = ssub.s32 %s21, %s33
      %p91 = scmp.eq.s32.totalorder %s90, 0
      %s93 = sadd.s32 %s92, 1
      %s94 = scalar_select %p91, %s92, %s93
      %p97 = pneg %p91
      %p98 = scmp.eq.s32.totalorder %s14, 1
      %p99 = por %p97, %p98
      %p100 = scmp.ne.s32.totalorder %s92, %s95
      %p101 = scmp.eq.s32.totalorder %s14, 0
      %p102 = por %p100, %p101
      %p103 = scmp.ne.s32.totalorder %s92, %s95
      %p104 = scmp.eq.s32.totalorder %s19, 1
      %p105 = por %p103, %p104
      %p106 = scmp.ne.s32.totalorder %s95, %s96
      %p107 = scmp.eq.s32.totalorder %s19, 0
      %p108 = por %p106, %p107
      %p109 = scmp.ne.s32.totalorder %s95, %s96
      %p110 = scmp.eq.s32.totalorder %s20, 1
      %p111 = por %p109, %p110
      %p113 = scmp.ne.s32.totalorder %s96, %s112
      %p114 = scmp.eq.s32.totalorder %s20, 0
      %p115 = por %p113, %p114
      %p116 = scmp.le.s32.totalorder 1, %s14
      %p117 = scmp.lt.s32.totalorder %s14, 3
      %p118 = pnand %p116, %p117
      %p119 = pneg %p118
      // Predicated region
      $region9: #{tpu_custom_call.1} parent=5 // pred_check
        _
      $region10: #{tpu_custom_call.1} parent=5 // pred_check_branch
        %121 = sbr.rel (%p118) target = $region12
      $region11: #{tpu_custom_call.1} parent=5 // pred_region
        %s122 = ssub.s32 %s14, 1
      $region12: #{tpu_custom_call.1} parent=5 // pred_fallthru
        _
      %p123 = scmp.lt.s32.totalorder %s14, 2
      // Predicated region
      $region13: #{tpu_custom_call.1} parent=5 // pred_check
        %p124 = pneg %p123
      $region14: #{tpu_custom_call.1} parent=5 // pred_check_branch
        %126 = sbr.rel (%p124) target = $region16
      $region15: #{tpu_custom_call.1} parent=5 // pred_region
        // Predicated region
        $region17: #{tpu_custom_call.1} parent=15 // pred_check
          %p127 = pneg %p48
        $region18: #{tpu_custom_call.1} parent=15 // pred_check_branch
          %129 = sbr.rel (%p127) target = $region20
        $region19: #{tpu_custom_call.1} parent=15 // pred_region
          %s130 = sand.u32 %s38, 1
          %s131 = scalar_lea.sflag [#allocation4], %s130
          %s132 = sand.u32 %s38, 1
          %s133 = smul.addr %s132, 16
          %s134 = scalar_lea.vmem [#allocation3], %s133
          %s135 = smul.u32 2, %s22
          %137 = vsyncadd %s131, 0
          %s138 = smul.addr %s21, 2
          %s139 = sadd.s32 %s135, %s138
          %s140 = smul.addr %s139, 8
          %s141 = scalar_lea.hbm %s0, %s140
          %s143 = sshll.u32 %s141, 4
          %s144 = int_to_ptr.hbm [resolvable:$true] %s143
          %s145 = sshll.u32 %s134, 4
          %s146 = int_to_ptr.vmem [resolvable:$true] %s145
          %148 = dma.hbm_to_vmem [thread:$0]  %s144, 256, %s146, %s131
        $region20: #{tpu_custom_call.1} parent=15 // pred_fallthru
          _
        // Predicated region
        $region21: #{tpu_custom_call.1} parent=15 // pred_check
          %p149 = pneg %p76
        $region22: #{tpu_custom_call.1} parent=15 // pred_check_branch
          %151 = sbr.rel (%p149) target = $region24
        $region23: #{tpu_custom_call.1} parent=15 // pred_region
          %s152 = sand.u32 %s66, 1
          %s153 = scalar_lea.sflag [#allocation6], %s152
          %s154 = sand.u32 %s66, 1
          %s155 = smul.addr %s154, 32
          %s156 = scalar_lea.vmem [#allocation5], %s155
          %s157 = smul.u32 2, %s22
          %159 = vsyncadd %s153, 0
          %s160 = smul.addr %s21, 4
          %s161 = sadd.s32 %s157, %s160
          %s162 = smul.addr %s161, 8
          %s163 = scalar_lea.hbm %s1, %s162
          %s164 = sshll.u32 %s163, 4
          %s165 = int_to_ptr.hbm [resolvable:$true] %s164
          %s166 = sshll.u32 %s156, 4
          %s167 = int_to_ptr.vmem [resolvable:$true] %s166
          %172 = dma.hbm_to_vmem [thread:$0]  %s165, 512, %s167, %s153, 256, 256, 16
        $region24: #{tpu_custom_call.1} parent=15 // pred_fallthru
          _
      $region16: #{tpu_custom_call.1} parent=5 // pred_fallthru
        _
      %p173 = scmp.le.s32.totalorder 1, %s14
      %p174 = scmp.lt.s32.totalorder %s14, 3
      %p175 = pnand %p173, %p174
      %p176 = pneg %p175
      // Predicated region
      $region25: #{tpu_custom_call.1} parent=5 // pred_check
        _
      $region26: #{tpu_custom_call.1} parent=5 // pred_check_branch
        %178 = sbr.rel (%p175) target = $region28
      $region27: #{tpu_custom_call.1} parent=5 // pred_region
        %s179 = ssub.s32 %s14, 1
        %s180 = sand.u32 %s41, 1
        %s181 = scalar_lea.sflag [#allocation4], %s180
        %s182 = sand.u32 %s41, 1
        %s183 = smul.addr %s182, 16
        %s184 = scalar_lea.vmem [#allocation3], %s183
        // Predicated region
        $region29: #{tpu_custom_call.1} parent=27 // pred_check
          %p185 = pneg %p54
        $region30: #{tpu_custom_call.1} parent=27 // pred_check_branch
          %187 = sbr.rel (%p185) target = $region32
        $region31: #{tpu_custom_call.1} parent=27 // pred_region
          %189 = dma.done %s181, 256
        $region32: #{tpu_custom_call.1} parent=27 // pred_fallthru
          _
        %s190 = sand.u32 %s69, 1
        %s191 = scalar_lea.sflag [#allocation6], %s190
        %s192 = sand.u32 %s69, 1
        %s193 = smul.addr %s192, 32
        %s194 = scalar_lea.vmem [#allocation5], %s193
        // Predicated region
        $region33: #{tpu_custom_call.1} parent=27 // pred_check
          %p195 = pneg %p82
        $region34: #{tpu_custom_call.1} parent=27 // pred_check_branch
          %197 = sbr.rel (%p195) target = $region36
        $region35: #{tpu_custom_call.1} parent=27 // pred_region
          %199 = dma.done %s191, 512
        $region36: #{tpu_custom_call.1} parent=27 // pred_fallthru
          _
        %s200 = sand.u32 %s41, 1
        %s201 = scalar_lea.sflag [#allocation4], %s200
        %s202 = sand.u32 %s41, 1
        %s203 = smul.addr %s202, 16
        %s204 = scalar_lea.vmem [#allocation3], %s203
        %p205 = pneg %p54
        %p206 = pneg %p51
        %s207 = sand.u32 %s69, 1
        %s208 = scalar_lea.sflag [#allocation6], %s207
        %s209 = sand.u32 %s69, 1
        %s210 = smul.addr %s209, 32
        %s211 = scalar_lea.vmem [#allocation5], %s210
        %p212 = pneg %p82
        %p213 = pneg %p79
        %p214 = pneg %p108
        %p215 = pneg %p105
        %p216 = scmp.lt.s32.totalorder %s23, 1
        %s217 = scalar_select %p216, %s23, 1
        %s218 = scalar_lea.vmem %s2, %s217
        %s219 = smul.u32 2, %s24
        %s220 = smul.u32 2, %s24
        %p221 = scmp.lt.s32.totalorder %s23, 1
        %s222 = scalar_select %p221, %s23, 1
        %s223 = scalar_lea.vmem %s2, %s222
        %p224 = scmp.eq.s32.totalorder %s24, 0
        // Predicated region
        $region37: #{tpu_custom_call.1} parent=27 // pred_check
          %p225 = pneg %p224
        $region38: #{tpu_custom_call.1} parent=27 // pred_check_branch
          %227 = sbr.rel (%p225) target = $region40
        $region39: #{tpu_custom_call.1} parent=27 // pred_region
          %228 = vst [vmem:[#allocation2] sm:$0xff] 0.0
          %229 = vst [vmem:[#allocation2 + $0x8] sm:$0xff] 0.0
        $region40: #{tpu_custom_call.1} parent=27 // pred_fallthru
          _
        %v230 = vld [vmem:[#allocation2] sm:$0xff]
        %v231 = vld [vmem:[#allocation2 + $0x8] sm:$0xff]
        %v232 = vld [vmem:[%s184] sm:$0xff]
        %v233 = vld [vmem:[%s184 + $0x8] sm:$0xff]
        %v234 = vand.u32 2147483647, %v232
        %v235 = vand.u32 2147483647, %v233
        %v236 = vmax.f32 %v230, %v234
        %v237 = vmax.f32 %v231, %v235
        %v238 = vld [vmem:[%s194] sm:$0xff]
        %v239 = vld [vmem:[%s194 + $0x8] sm:$0xff]
        %v240 = vld [vmem:[%s194 + $0x10] sm:$0xff]
        %v241 = vld [vmem:[%s194 + $0x18] sm:$0xff]
        %v242 = vand.u32 2147483647, %v238
        %v243 = vand.u32 2147483647, %v239
        %v244 = vand.u32 2147483647, %v240
        %v245 = vand.u32 2147483647, %v241
        %v246 = vmax.f32 %v236, %v242
        %v247 = vmax.f32 %v237, %v243
        %v248 = vmax.f32 %v246, %v244
        %v249 = vmax.f32 %v247, %v245
        %250 = vst [vmem:[#allocation2] sm:$0xff] %v248
        %251 = vst [vmem:[#allocation2 + $0x8] sm:$0xff] %v249
        // Predicated region
        $region41: #{tpu_custom_call.1} parent=27 // pred_check
          %p252 = pneg %p224
        $region42: #{tpu_custom_call.1} parent=27 // pred_check_branch
          %254 = sbr.rel (%p252) target = $region44
        $region43: #{tpu_custom_call.1} parent=27 // pred_region
          %v255 = vld [vmem:[#allocation2] sm:$0xff]
          %v256 = vld [vmem:[#allocation2 + $0x8] sm:$0xff]
          %v257 = vmax.f32 %v255, %v256
          %258 = vmax.xlane.f32.xlu0 %v257
          %v259 = vpop.xlane.xlu0 %258
          %v260 = vrot.slane %v259, 4
          %v261 = vmax.f32 %v259, %v260
          %v262 = vrot.slane %v261, 2
          %v263 = vmax.f32 %v261, %v262
          %v264 = vrot.slane %v263, 1
          %v265 = vmax.f32 %v263, %v264
          %s266 = vtos %v265
          %v267 = vstv %s266
          %vm268 = vcmask 0
          %269 = vst.msk [vmem:[%s223] sm:$0x1] %vm268, %v267
        $region44: #{tpu_custom_call.1} parent=27 // pred_fallthru
          _
        %p270 = scmp.lt.s32.totalorder %s23, 1
        %s271 = scalar_select %p270, %s23, 1
        %s272 = scalar_lea.vmem %s2, %s271
        // Predicated region
        $region45: #{tpu_custom_call.1} parent=27 // pred_check
          %p273 = pneg %p105
        $region46: #{tpu_custom_call.1} parent=27 // pred_check_branch
          %275 = sbr.rel (%p273) target = $region48
        $region47: #{tpu_custom_call.1} parent=27 // pred_region
          _
        $region48: #{tpu_custom_call.1} parent=27 // pred_fallthru
          _
      $region28: #{tpu_custom_call.1} parent=5 // pred_fallthru
        _
      %p276 = scmp.le.s32.totalorder 2, %s14
      // Predicated region
      $region49: #{tpu_custom_call.1} parent=5 // pred_check
        %p277 = pneg %p276
      $region50: #{tpu_custom_call.1} parent=5 // pred_check_branch
        %279 = sbr.rel (%p277) target = $region52
      $region51: #{tpu_custom_call.1} parent=5 // pred_region
        %s280 = ssub.s32 %s14, 2
        // Predicated region
        $region53: #{tpu_custom_call.1} parent=51 // pred_check
          %p281 = pneg %p111
        $region54: #{tpu_custom_call.1} parent=51 // pred_check_branch
          %283 = sbr.rel (%p281) target = $region56
        $region55: #{tpu_custom_call.1} parent=51 // pred_region
          %p284 = scmp.lt.s32.totalorder %s25, 1
          %s285 = scalar_select %p284, %s25, 1
          %s286 = scalar_lea.vmem %s2, %s285
        $region56: #{tpu_custom_call.1} parent=51 // pred_fallthru
          _
      $region52: #{tpu_custom_call.1} parent=5 // pred_fallthru
        _
    $region6: #{tpu_custom_call.1} parent=1 // loop_footer
      %s18 = sadd.s32 1, %s14
    $region7: #{tpu_custom_call.1} parent=1 // loop_footer_branch
      %13 = sbr.rel target = $region3
    $region8: #{tpu_custom_call.1} parent=1 // loop_exit
      _
    %287 = vsyncpa [#allocation4], 1
    %s288 = scalar_lea.sflag [#allocation4], 1
    %289 = vsyncpa %s288, 1
    %290 = vsyncpa [#allocation6], 1
    %s291 = scalar_lea.sflag [#allocation6], 1
    %292 = vsyncpa %s291, 1

</llo_original>
